<compile_context>
chip_gen: v5e
topology: v5e:2x2
jax: 0.10.0
libtpu: 0.0.40
codegen_flags: <defaults>
</compile_context>

<pallas_src>
import functools

import jax
import jax.numpy as jnp
from jax.experimental import pallas as pl
from jax.experimental.pallas import tpu as pltpu

NUM_NEURONS = 128
OUT_PAD = 128          # lane-dense padded output width (fc3 cols zero-padded)
MAX_BATCH_TILE = 1024  # per-grid-step batch rows; ~2 MiB VMEM at this size


def policy_net_kernel(x_ref, w1_ref, b1_ref, w2_ref, b2_ref, w3_ref, b3_ref,
                      o_ref):
    # fc1 + relu: bf16 operands -> MXU, f32 accumulate, f32 elementwise.
    h1 = jnp.dot(x_ref[...], w1_ref[...], preferred_element_type=jnp.float32)
    h1 = jnp.maximum(h1 + b1_ref[...], 0.0)
    # fc2 + relu
    h2 = jnp.dot(h1.astype(jnp.bfloat16), w2_ref[...],
                 preferred_element_type=jnp.float32)
    h2 = jnp.maximum(h2 + b2_ref[...], 0.0)
    # fc3 (padded to 128 lanes) + tanh * 5.0; store bf16 (lane-dense vst,
    # halves HBM writeback bytes).
    h3 = jnp.dot(h2.astype(jnp.bfloat16), w3_ref[...],
                 preferred_element_type=jnp.float32)
    o_ref[...] = (jnp.tanh(h3 + b3_ref[...]) * 5.0).astype(o_ref.dtype)


def _round_up(x, m):
    return (x + m - 1) // m * m


def _tensorcores_per_device():
    """Best-effort detection of TCs per device (v7x has 2, v5e/v6e have 1)."""
    try:
        kind = jax.devices()[0].device_kind.lower()
    except Exception:  # pragma: no cover - defensive
        return 1
    return 2 if "v7" in kind else 1


def _batch_tiling(B, cap, min_tiles):
    """Pick (tb, num_tiles, b_pad) with minimal padding waste."""
    num_tiles = max(pl.cdiv(B, cap), min_tiles)
    tb = _round_up(pl.cdiv(B, num_tiles), 8)
    return tb, num_tiles, tb * num_tiles


def prepare_policy_params(params):
    """One-time weight prep: bf16 casts + fc3 zero-pad to 128 output lanes.

    Keeps the jitted forward free of per-call convert/pad ops.  Padded fc3
    columns are zero -> tanh(0)*5 = 0 -> sliced off in the wrapper.
    """
    action_dim = params["w3"].shape[1]
    assert action_dim <= OUT_PAD
    w3p = jnp.zeros((NUM_NEURONS, OUT_PAD), jnp.float32).at[:, :action_dim].set(
        params["w3"])
    b3p = jnp.zeros((1, OUT_PAD), jnp.float32).at[:, :action_dim].set(
        params["b3"])
    return {
        "w1": params["w1"].astype(jnp.bfloat16),
        "b1": params["b1"],                      # biases stay f32 (VPU adds)
        "w2": params["w2"].astype(jnp.bfloat16),
        "b2": params["b2"],
        "w3": w3p.astype(jnp.bfloat16),
        "b3": b3p,
    }


@functools.partial(jax.jit, static_argnames=("action_dim", "min_tiles"))
def policy_net_forward(state, kparams, *, action_dim, min_tiles=1):
    """state: [B, state_dim] float32 -> action: [B, action_dim] float32."""
    B, state_dim = state.shape
    tb, num_tiles, b_pad = _batch_tiling(B, MAX_BATCH_TILE, min_tiles)

    # bf16 on the wrapper side: halves streamed input DMA bytes.
    x = state.astype(jnp.bfloat16)
    if b_pad != B:
        x = jnp.pad(x, ((0, b_pad - B), (0, 0)))

    # Weights/biases: constant index_map -> VMEM-resident, DMA'd once.
    resident = lambda arr: pl.BlockSpec(arr.shape, lambda i: (0, 0))

    out_padded = pl.pallas_call(
        policy_net_kernel,
        out_shape=jax.ShapeDtypeStruct((b_pad, OUT_PAD), jnp.bfloat16),
        grid=(num_tiles,),
        in_specs=[
            pl.BlockSpec((tb, state_dim), lambda i: (i, 0)),   # streamed state
            resident(kparams["w1"]), resident(kparams["b1"]),
            resident(kparams["w2"]), resident(kparams["b2"]),
            resident(kparams["w3"]), resident(kparams["b3"]),
        ],
        out_specs=pl.BlockSpec((tb, OUT_PAD), lambda i: (i, 0)),
        compiler_params=pltpu.CompilerParams(
            dimension_semantics=("parallel",)),
    )(x, kparams["w1"], kparams["b1"], kparams["w2"], kparams["b2"],
      kparams["w3"], kparams["b3"])

    return out_padded[:B, :action_dim].astype(jnp.float32)


def policy_net_apply(state, kparams, action_dim):
    """Convenience wrapper: picks min_tiles so both v7x TCs get work."""
    min_tiles = 2 if (_tensorcores_per_device() >= 2
                      and state.shape[0] >= 16) else 1
    return policy_net_forward(state, kparams, action_dim=action_dim,
                              min_tiles=min_tiles)


def init_policy_net_params(key, state_dim, action_dim):
    """Deterministic init mirroring the PyTorch module's __init__.

    fc1/fc2: PyTorch default nn.Linear init  U(-1/sqrt(fan_in), 1/sqrt(fan_in))
    fc3:     nn.init.uniform_(-0.003, 0.003) for both weight and bias.
    Weights are stored as [in, out] (transposed vs. PyTorch's [out, in]).
    """
    k1, k2, k3, k4, k5, k6 = jax.random.split(key, 6)
    bound1 = 1.0 / jnp.sqrt(jnp.float32(state_dim))
    bound2 = 1.0 / jnp.sqrt(jnp.float32(NUM_NEURONS))
    return {
        "w1": jax.random.uniform(k1, (state_dim, NUM_NEURONS), jnp.float32,
                                 -bound1, bound1),
        "b1": jax.random.uniform(k2, (1, NUM_NEURONS), jnp.float32,
                                 -bound1, bound1),
        "w2": jax.random.uniform(k3, (NUM_NEURONS, NUM_NEURONS), jnp.float32,
                                 -bound2, bound2),
        "b2": jax.random.uniform(k4, (1, NUM_NEURONS), jnp.float32,
                                 -bound2, bound2),
        "w3": jax.random.uniform(k5, (NUM_NEURONS, action_dim), jnp.float32,
                                 -0.003, 0.003),
        "b3": jax.random.uniform(k6, (1, action_dim), jnp.float32,
                                 -0.003, 0.003),
    }


def _reference_forward_f32(state, params):
    h1 = jnp.maximum(state @ params["w1"] + params["b1"], 0.0)
    h2 = jnp.maximum(h1 @ params["w2"] + params["b2"], 0.0)
    return jnp.tanh(h2 @ params["w3"] + params["b3"]) * 5.0


def _reference_forward_bf16(state, params):
    # Mirrors the kernel's bf16-operand / f32-accumulate arithmetic (final
    # result kept in f32; kernel additionally rounds its store to bf16).
    bf = jnp.bfloat16
    h1 = jnp.dot(state.astype(bf), params["w1"].astype(bf),
                 preferred_element_type=jnp.float32)
    h1 = jnp.maximum(h1 + params["b1"], 0.0)
    h2 = jnp.dot(h1.astype(bf), params["w2"].astype(bf),
                 preferred_element_type=jnp.float32)
    h2 = jnp.maximum(h2 + params["b2"], 0.0)
    h3 = jnp.dot(h2.astype(bf), params["w3"].astype(bf),
                 preferred_element_type=jnp.float32)
    return jnp.tanh(h3 + params["b3"]) * 5.0


if __name__ == "__main__":
    key = jax.random.PRNGKey(0)
    k_params, k_state, k_state2 = jax.random.split(key, 3)

    batch = 8
    state_dim = 16
    action_dim = 8

    params = init_policy_net_params(k_params, state_dim, action_dim)
    kparams = jax.tree_util.tree_map(jax.block_until_ready,
                                     prepare_policy_params(params))

    # --- small (latency-bound actor) batch ---
    state = jax.random.normal(k_state, (batch, state_dim), dtype=jnp.float32)
    action = jax.block_until_ready(policy_net_apply(state, kparams, action_dim))
    assert action.shape == (batch, action_dim)
    assert action.dtype == jnp.float32

    ref_bf = jax.block_until_ready(_reference_forward_bf16(state, params))
    ref_f32 = jax.block_until_ready(_reference_forward_f32(state, params))
    # Kernel stores bf16 -> allow bf16 rounding on top of the bf16-dot mirror.
    assert jnp.allclose(action, ref_bf, atol=3e-2, rtol=3e-2), \
        "mismatch vs bf16-mirrored reference"
    assert jnp.allclose(action, ref_f32, atol=5e-2, rtol=5e-2), \
        "mismatch vs f32 reference"

    # --- ragged batch (exercises padding + multi-tile path) ---
    batch2 = 20
    state2 = jax.random.normal(k_state2, (batch2, state_dim), dtype=jnp.float32)
    action2 = jax.block_until_ready(policy_net_apply(state2, kparams,
                                                     action_dim))
    assert action2.shape == (batch2, action_dim)
    ref2 = jax.block_until_ready(_reference_forward_bf16(state2, params))
    assert jnp.allclose(action2, ref2, atol=3e-2, rtol=3e-2), \
        "mismatch vs bf16-mirrored reference (ragged batch)"

    print("KERNEL_OK")
</pallas_src>

<mosaic_0001>
module attributes {stable_mosaic.version = 11 : i64} {
  func.func @policy_net_kernel(%arg0: i32, %arg1: memref<8x16xbf16, #tpu.memory_space<vmem>>, %arg2: memref<16x128xbf16, #tpu.memory_space<vmem>>, %arg3: memref<1x128xf32, #tpu.memory_space<vmem>>, %arg4: memref<128x128xbf16, #tpu.memory_space<vmem>>, %arg5: memref<1x128xf32, #tpu.memory_space<vmem>>, %arg6: memref<128x128xbf16, #tpu.memory_space<vmem>>, %arg7: memref<1x128xf32, #tpu.memory_space<vmem>>, %arg8: memref<8x128xbf16, #tpu.memory_space<vmem>>) attributes {dimension_semantics = [#tpu.dimension_semantics<parallel>], iteration_bounds = array<i64: 1>, scalar_prefetch = 0 : i64, scratch_operands = 0 : i64, tpu.core_type = #tpu.core_type<tc>, window_params = [{transform_indices = @transform_0, window_bounds = array<i64: 8, 16>}, {pipeline_mode = #tpu.pipeline_mode<synchronous>, transform_indices = @transform_1, window_bounds = array<i64: 16, 128>}, {pipeline_mode = #tpu.pipeline_mode<synchronous>, transform_indices = @transform_2, window_bounds = array<i64: 1, 128>}, {pipeline_mode = #tpu.pipeline_mode<synchronous>, transform_indices = @transform_3, window_bounds = array<i64: 128, 128>}, {pipeline_mode = #tpu.pipeline_mode<synchronous>, transform_indices = @transform_4, window_bounds = array<i64: 1, 128>}, {pipeline_mode = #tpu.pipeline_mode<synchronous>, transform_indices = @transform_5, window_bounds = array<i64: 128, 128>}, {pipeline_mode = #tpu.pipeline_mode<synchronous>, transform_indices = @transform_6, window_bounds = array<i64: 1, 128>}, {transform_indices = @transform_7, window_bounds = array<i64: 8, 128>}]} {
    %c0 = arith.constant 0 : index
    %c0_0 = arith.constant 0 : index
    %0 = vector.load %arg1[%c0, %c0_0] : memref<8x16xbf16, #tpu.memory_space<vmem>>, vector<8x16xbf16>
    %c0_1 = arith.constant 0 : index
    %c0_2 = arith.constant 0 : index
    %1 = vector.load %arg2[%c0_1, %c0_2] : memref<16x128xbf16, #tpu.memory_space<vmem>>, vector<16x128xbf16>
    %cst = arith.constant dense<0.000000e+00> : vector<8x128xf32>
    %2 = tpu.matmul %0, %1, %cst {dimension_numbers = #tpu.dot_dimension_numbers<[1], [0], [0], [1], [0, 0, 1, 1], [], []>} : vector<8x16xbf16>, vector<16x128xbf16>, vector<8x128xf32> -> vector<8x128xf32>
    %c0_3 = arith.constant 0 : index
    %c0_4 = arith.constant 0 : index
    %3 = vector.load %arg3[%c0_3, %c0_4] : memref<1x128xf32, #tpu.memory_space<vmem>>, vector<1x128xf32>
    %4 = vector.broadcast %3 : vector<1x128xf32> to vector<8x128xf32>
    %5 = arith.addf %2, %4 : vector<8x128xf32>
    %cst_5 = arith.constant 0.000000e+00 : f32
    %6 = vector.broadcast %cst_5 : f32 to vector<8x128xf32>
    %7 = arith.maximumf %5, %6 : vector<8x128xf32>
    %8 = arith.truncf %7 : vector<8x128xf32> to vector<8x128xbf16>
    %c0_6 = arith.constant 0 : index
    %c0_7 = arith.constant 0 : index
    %9 = vector.load %arg4[%c0_6, %c0_7] : memref<128x128xbf16, #tpu.memory_space<vmem>>, vector<128x128xbf16>
    %cst_8 = arith.constant dense<0.000000e+00> : vector<8x128xf32>
    %10 = tpu.matmul %8, %9, %cst_8 {dimension_numbers = #tpu.dot_dimension_numbers<[1], [0], [0], [1], [0, 0, 1, 1], [], []>} : vector<8x128xbf16>, vector<128x128xbf16>, vector<8x128xf32> -> vector<8x128xf32>
    %c0_9 = arith.constant 0 : index
    %c0_10 = arith.constant 0 : index
    %11 = vector.load %arg5[%c0_9, %c0_10] : memref<1x128xf32, #tpu.memory_space<vmem>>, vector<1x128xf32>
    %12 = vector.broadcast %11 : vector<1x128xf32> to vector<8x128xf32>
    %13 = arith.addf %10, %12 : vector<8x128xf32>
    %cst_11 = arith.constant 0.000000e+00 : f32
    %14 = vector.broadcast %cst_11 : f32 to vector<8x128xf32>
    %15 = arith.maximumf %13, %14 : vector<8x128xf32>
    %16 = arith.truncf %15 : vector<8x128xf32> to vector<8x128xbf16>
    %c0_12 = arith.constant 0 : index
    %c0_13 = arith.constant 0 : index
    %17 = vector.load %arg6[%c0_12, %c0_13] : memref<128x128xbf16, #tpu.memory_space<vmem>>, vector<128x128xbf16>
    %cst_14 = arith.constant dense<0.000000e+00> : vector<8x128xf32>
    %18 = tpu.matmul %16, %17, %cst_14 {dimension_numbers = #tpu.dot_dimension_numbers<[1], [0], [0], [1], [0, 0, 1, 1], [], []>} : vector<8x128xbf16>, vector<128x128xbf16>, vector<8x128xf32> -> vector<8x128xf32>
    %c0_15 = arith.constant 0 : index
    %c0_16 = arith.constant 0 : index
    %19 = vector.load %arg7[%c0_15, %c0_16] : memref<1x128xf32, #tpu.memory_space<vmem>>, vector<1x128xf32>
    %20 = vector.broadcast %19 : vector<1x128xf32> to vector<8x128xf32>
    %21 = arith.addf %18, %20 : vector<8x128xf32>
    %22 = math.tanh %21 : vector<8x128xf32>
    %cst_17 = arith.constant 5.000000e+00 : f32
    %23 = vector.broadcast %cst_17 : f32 to vector<8x128xf32>
    %24 = arith.mulf %22, %23 : vector<8x128xf32>
    %25 = arith.truncf %24 : vector<8x128xf32> to vector<8x128xbf16>
    %c0_18 = arith.constant 0 : index
    %c0_19 = arith.constant 0 : index
    %26 = vector.load %arg8[%c0_18, %c0_19] : memref<8x128xbf16, #tpu.memory_space<vmem>>, vector<8x128xbf16>
    tpu.vector_store %arg8[%c0_18, %c0_19], %25 {strides = array<i32>} : memref<8x128xbf16, #tpu.memory_space<vmem>>, vector<8x128xbf16>,
    return
  }
  func.func @transform_0(%arg0: i32) -> (i32, i32) {
    %c0_i32 = arith.constant 0 : i32
    %c0_i32_0 = arith.constant 0 : i32
    return %arg0, %c0_i32 : i32, i32
  }
  func.func @transform_1(%arg0: i32) -> (i32, i32) {
    %c0_i32 = arith.constant 0 : i32
    %c0_i32_0 = arith.constant 0 : i32
    %c0_i32_1 = arith.constant 0 : i32
    return %c0_i32, %c0_i32_0 : i32, i32
  }
  func.func @transform_2(%arg0: i32) -> (i32, i32) {
    %c0_i32 = arith.constant 0 : i32
    %c0_i32_0 = arith.constant 0 : i32
    %c0_i32_1 = arith.constant 0 : i32
    return %c0_i32, %c0_i32_0 : i32, i32
  }
  func.func @transform_3(%arg0: i32) -> (i32, i32) {
    %c0_i32 = arith.constant 0 : i32
    %c0_i32_0 = arith.constant 0 : i32
    %c0_i32_1 = arith.constant 0 : i32
    return %c0_i32, %c0_i32_0 : i32, i32
  }
  func.func @transform_4(%arg0: i32) -> (i32, i32) {
    %c0_i32 = arith.constant 0 : i32
    %c0_i32_0 = arith.constant 0 : i32
    %c0_i32_1 = arith.constant 0 : i32
    return %c0_i32, %c0_i32_0 : i32, i32
  }
  func.func @transform_5(%arg0: i32) -> (i32, i32) {
    %c0_i32 = arith.constant 0 : i32
    %c0_i32_0 = arith.constant 0 : i32
    %c0_i32_1 = arith.constant 0 : i32
    return %c0_i32, %c0_i32_0 : i32, i32
  }
  func.func @transform_6(%arg0: i32) -> (i32, i32) {
    %c0_i32 = arith.constant 0 : i32
    %c0_i32_0 = arith.constant 0 : i32
    %c0_i32_1 = arith.constant 0 : i32
    return %c0_i32, %c0_i32_0 : i32, i32
  }
  func.func @transform_7(%arg0: i32) -> (i32, i32) {
    %c0_i32 = arith.constant 0 : i32
    %c0_i32_0 = arith.constant 0 : i32
    return %arg0, %c0_i32 : i32, i32
  }
}

</mosaic_0001>

<llo_original>
// kernel: policy_net_forward.1
$region0: #{policy_net_forward.1}
  #allocation0 [shape = 'u32[]', space=smem, size = 0x4, offset = 0x4, fixed_abs, tag = 'smem constant byte address 0x4 - core index']
  #allocation1 [shape = 'u32[72,128]{1,0:T(1,128)}', space=vmem, size = 0x9000, scoped, tag = 'internal scratch']
  %s0 = inlined_call_operand.vmem [shape: bf16[8,16], index: 0, kind: input, shape index: {}]
  %s1 = inlined_call_operand.vmem [shape: bf16[16,128], index: 1, kind: input, shape index: {}]
  %s2 = inlined_call_operand.vmem [shape: f32[1,128], index: 2, kind: input, shape index: {}]
  %s3 = inlined_call_operand.hbm [shape: bf16[128,128], index: 3, kind: input, shape index: {}]
  %s4 = inlined_call_operand.vmem [shape: f32[1,128], index: 4, kind: input, shape index: {}]
  %s5 = inlined_call_operand.hbm [shape: bf16[128,128], index: 5, kind: input, shape index: {}]
  %s6 = inlined_call_operand.vmem [shape: f32[1,128], index: 6, kind: input, shape index: {}]
  %s7 = inlined_call_operand.vmem [shape: bf16[8,128], index: 7, kind: output, shape index: {}]
  %s8 = sld [smem:[#allocation0]]
  $region46: #{policy_net_forward.1} parent=0
    _
  %s10 = ssub.s32 1, %s8
  %s11 = scalar_select 0, %s10, %s8
  $region1: #{policy_net_forward.1} parent=0
    #allocation2 [shape = 'u8[32768]{0}', space=vmem, size = 0x8000, scoped, tag = 'input window, operand 3, single buffered']
    #allocation3 [shape = 's32[1]{0}', space=sflag, size = 0x4, scoped, tag = 'scoped memory for policy_net_forward.1']
    #allocation4 [shape = 'u8[32768]{0}', space=vmem, size = 0x8000, scoped, tag = 'input window, operand 5, single buffered']
    #allocation5 [shape = 's32[1]{0}', space=sflag, size = 0x4, scoped, tag = 'scoped memory for policy_net_forward.1']
    %12 = vsyncpa [#allocation3], 0
    %13 = vsyncpa [#allocation5], 0
    // Predicated region
    $region2: #{policy_net_forward.1} parent=1 // pred_check
      _
    $region3: #{policy_net_forward.1} parent=1 // pred_check_branch
      %15 = sbr.rel (0) target = $region5
    $region4: #{policy_net_forward.1} parent=1 // pred_region
      _
    $region5: #{policy_net_forward.1} parent=1 // pred_fallthru
      _
    // Predicated region
    $region6: #{policy_net_forward.1} parent=1 // pred_check
      _
    $region7: #{policy_net_forward.1} parent=1 // pred_check_branch
      %17 = sbr.rel (0) target = $region9
    $region8: #{policy_net_forward.1} parent=1 // pred_region
      _
    $region9: #{policy_net_forward.1} parent=1 // pred_fallthru
      _
    // Predicated region
    $region10: #{policy_net_forward.1} parent=1 // pred_check
      _
    $region11: #{policy_net_forward.1} parent=1 // pred_check_branch
      %19 = sbr.rel (0) target = $region13
    $region12: #{policy_net_forward.1} parent=1 // pred_region
      _
    $region13: #{policy_net_forward.1} parent=1 // pred_fallthru
      _
    // Predicated region
    $region14: #{policy_net_forward.1} parent=1 // pred_check
      _
    $region15: #{policy_net_forward.1} parent=1 // pred_check_branch
      %21 = sbr.rel (0) target = $region17
    $region16: #{policy_net_forward.1} parent=1 // pred_region
      %23 = vsyncadd [#allocation3], 0
      %s24 = sshll.u32 %s3, 4
      %s25 = int_to_ptr.hbm [resolvable:$true] %s24
      %s26 = sshll.u32 [#allocation2], 4
      %s27 = int_to_ptr.vmem [resolvable:$true] %s26
      %32 = dma.hbm_to_vmem [thread:$0]  %s25, 1024, %s27, [#allocation3], 64, 64, 4
    $region17: #{policy_net_forward.1} parent=1 // pred_fallthru
      _
    // Predicated region
    $region18: #{policy_net_forward.1} parent=1 // pred_check
      _
    $region19: #{policy_net_forward.1} parent=1 // pred_check_branch
      %34 = sbr.rel (0) target = $region21
    $region20: #{policy_net_forward.1} parent=1 // pred_region
      _
    $region21: #{policy_net_forward.1} parent=1 // pred_fallthru
      _
    // Predicated region
    $region22: #{policy_net_forward.1} parent=1 // pred_check
      _
    $region23: #{policy_net_forward.1} parent=1 // pred_check_branch
      %36 = sbr.rel (0) target = $region25
    $region24: #{policy_net_forward.1} parent=1 // pred_region
      %38 = vsyncadd [#allocation5], 0
      %s39 = sshll.u32 %s5, 4
      %s40 = int_to_ptr.hbm [resolvable:$true] %s39
      %s41 = sshll.u32 [#allocation4], 4
      %s42 = int_to_ptr.vmem [resolvable:$true] %s41
      %47 = dma.hbm_to_vmem [thread:$0]  %s40, 1024, %s42, [#allocation5], 64, 64, 4
    $region25: #{policy_net_forward.1} parent=1 // pred_fallthru
      _
    // Predicated region
    $region26: #{policy_net_forward.1} parent=1 // pred_check
      _
    $region27: #{policy_net_forward.1} parent=1 // pred_check_branch
      %49 = sbr.rel (0) target = $region29
    $region28: #{policy_net_forward.1} parent=1 // pred_region
      _
    $region29: #{policy_net_forward.1} parent=1 // pred_fallthru
      _
    // Predicated region
    $region30: #{policy_net_forward.1} parent=1 // pred_check
      _
    $region31: #{policy_net_forward.1} parent=1 // pred_check_branch
      %51 = sbr.rel (0) target = $region33
    $region32: #{policy_net_forward.1} parent=1 // pred_region
      %53 = dma.done [#allocation3], 1024
    $region33: #{policy_net_forward.1} parent=1 // pred_fallthru
      _
    // Predicated region
    $region34: #{policy_net_forward.1} parent=1 // pred_check
      _
    $region35: #{policy_net_forward.1} parent=1 // pred_check_branch
      %55 = sbr.rel (0) target = $region37
    $region36: #{policy_net_forward.1} parent=1 // pred_region
      %57 = dma.done [#allocation5], 1024
    $region37: #{policy_net_forward.1} parent=1 // pred_fallthru
      _
    %v59 = vld [vmem:[%s0] sm:$0xf]
    %v60 = vld [vmem:[%s1] sm:$0xf]
    %v61 = vld [vmem:[%s1 + $0x4] sm:$0xf]
    %v62 = vld [vmem:[%s2] sm:$0x1]
    %v64 = vperm.slane %v62, 0
    %v68 = vunpack.c.l.b16 %v60
    %v69 = vunpack.c.l.b16 %v61
    %v70 = vpack.c.b16 %v69, %v68
    %vm72 = vcmask 130048
    %v74 = vsel %vm72, %v59, 0
    %76 = vmatpush.bf16.msra.mxu0 0
    %77 = vmatpush.bf16.msra.mxu0 0
    %78 = vmatpush.bf16.msra.mxu0 0
    %79 = vmatpush.bf16.msra.mxu0 0
    %80 = vmatpush.bf16.msra.mxu0 0
    %81 = vmatpush.bf16.msra.mxu0 0
    %82 = vmatpush.bf16.msra.mxu0 0
    %83 = vmatpush.bf16.msra.mxu0 %v70
    %84 = vmatmul.bf16.gmra.mxu0 %v74
    %v85 = vpop.f32.mrf.mxu0
    %v86 = vadd.f32 %v64, %v85
    %v87 = vpop.f32.mrf.mxu0
    %88 = vdwg.mxu0
    %v89 = vmax.f32 %v86, 0.0
    %v90 = vpack.c.bf16 %v89, %v89
    %v91 = vld [vmem:[#allocation2] sm:$0xf]
    %v92 = vld [vmem:[#allocation2 + $0x4] sm:$0xf]
    %v93 = vld [vmem:[#allocation2 + $0x8] sm:$0xf]
    %v94 = vld [vmem:[#allocation2 + $0xc] sm:$0xf]
    %v95 = vld [vmem:[#allocation2 + $0x10] sm:$0xf]
    %v96 = vld [vmem:[#allocation2 + $0x14] sm:$0xf]
    %v97 = vld [vmem:[#allocation2 + $0x18] sm:$0xf]
    %v98 = vld [vmem:[#allocation2 + $0x1c] sm:$0xf]
    %v99 = vld [vmem:[#allocation2 + $0x20] sm:$0xf]
    %v100 = vld [vmem:[#allocation2 + $0x24] sm:$0xf]
    %v101 = vld [vmem:[#allocation2 + $0x28] sm:$0xf]
    %v102 = vld [vmem:[#allocation2 + $0x2c] sm:$0xf]
    %v103 = vld [vmem:[#allocation2 + $0x30] sm:$0xf]
    %v104 = vld [vmem:[#allocation2 + $0x34] sm:$0xf]
    %v105 = vld [vmem:[#allocation2 + $0x38] sm:$0xf]
    %v106 = vld [vmem:[#allocation2 + $0x3c] sm:$0xf]
    %v107 = vld [vmem:[%s4] sm:$0x1]
    %v109 = vperm.slane %v107, 0
    %v127 = vunpack.c.l.b16 %v91
    %v128 = vunpack.c.l.b16 %v92
    %v129 = vunpack.c.l.b16 %v93
    %v130 = vunpack.c.l.b16 %v94
    %v131 = vunpack.c.l.b16 %v95
    %v132 = vunpack.c.l.b16 %v96
    %v133 = vunpack.c.l.b16 %v97
    %v134 = vunpack.c.l.b16 %v98
    %v135 = vunpack.c.l.b16 %v99
    %v136 = vunpack.c.l.b16 %v100
    %v137 = vunpack.c.l.b16 %v101
    %v138 = vunpack.c.l.b16 %v102
    %v139 = vunpack.c.l.b16 %v103
    %v140 = vunpack.c.l.b16 %v104
    %v141 = vunpack.c.l.b16 %v105
    %v142 = vunpack.c.l.b16 %v106
    %v143 = vpack.c.b16 %v128, %v127
    %v144 = vpack.c.b16 %v130, %v129
    %v145 = vpack.c.b16 %v132, %v131
    %v146 = vpack.c.b16 %v134, %v133
    %v147 = vpack.c.b16 %v136, %v135
    %v148 = vpack.c.b16 %v138, %v137
    %v149 = vpack.c.b16 %v140, %v139
    %v150 = vpack.c.b16 %v142, %v141
    %159 = vmatpush.bf16.msra.mxu0 %v150
    %160 = vmatpush.bf16.msra.mxu0 %v149
    %161 = vmatpush.bf16.msra.mxu0 %v148
    %162 = vmatpush.bf16.msra.mxu0 %v147
    %163 = vmatpush.bf16.msra.mxu0 %v146
    %164 = vmatpush.bf16.msra.mxu0 %v145
    %165 = vmatpush.bf16.msra.mxu0 %v144
    %166 = vmatpush.bf16.msra.mxu0 %v143
    %167 = vmatmul.bf16.gmra.mxu0 %v90
    %v168 = vpop.f32.mrf.mxu0
    %v169 = vadd.f32 %v109, %v168
    %v170 = vpop.f32.mrf.mxu0
    %171 = vdwg.mxu0
    %v172 = vmax.f32 %v169, 0.0
    %v173 = vpack.c.bf16 %v172, %v172
    %v174 = vld [vmem:[#allocation4] sm:$0xf]
    %v175 = vld [vmem:[#allocation4 + $0x4] sm:$0xf]
    %v176 = vld [vmem:[#allocation4 + $0x8] sm:$0xf]
    %v177 = vld [vmem:[#allocation4 + $0xc] sm:$0xf]
    %v178 = vld [vmem:[#allocation4 + $0x10] sm:$0xf]
    %v179 = vld [vmem:[#allocation4 + $0x14] sm:$0xf]
    %v180 = vld [vmem:[#allocation4 + $0x18] sm:$0xf]
    %v181 = vld [vmem:[#allocation4 + $0x1c] sm:$0xf]
    %v182 = vld [vmem:[#allocation4 + $0x20] sm:$0xf]
    %v183 = vld [vmem:[#allocation4 + $0x24] sm:$0xf]
    %v184 = vld [vmem:[#allocation4 + $0x28] sm:$0xf]
    %v185 = vld [vmem:[#allocation4 + $0x2c] sm:$0xf]
    %v186 = vld [vmem:[#allocation4 + $0x30] sm:$0xf]
    %v187 = vld [vmem:[#allocation4 + $0x34] sm:$0xf]
    %v188 = vld [vmem:[#allocation4 + $0x38] sm:$0xf]
    %v189 = vld [vmem:[#allocation4 + $0x3c] sm:$0xf]
    %v190 = vld [vmem:[%s6] sm:$0x1]
    %v192 = vperm.slane %v190, 0
    %v210 = vunpack.c.l.b16 %v174
    %v211 = vunpack.c.l.b16 %v175
    %v212 = vunpack.c.l.b16 %v176
    %v213 = vunpack.c.l.b16 %v177
    %v214 = vunpack.c.l.b16 %v178
    %v215 = vunpack.c.l.b16 %v179
    %v216 = vunpack.c.l.b16 %v180
    %v217 = vunpack.c.l.b16 %v181
    %v218 = vunpack.c.l.b16 %v182
    %v219 = vunpack.c.l.b16 %v183
    %v220 = vunpack.c.l.b16 %v184
    %v221 = vunpack.c.l.b16 %v185
    %v222 = vunpack.c.l.b16 %v186
    %v223 = vunpack.c.l.b16 %v187
    %v224 = vunpack.c.l.b16 %v188
    %v225 = vunpack.c.l.b16 %v189
    %v226 = vpack.c.b16 %v211, %v210
    %v227 = vpack.c.b16 %v213, %v212
    %v228 = vpack.c.b16 %v215, %v214
    %v229 = vpack.c.b16 %v217, %v216
    %v230 = vpack.c.b16 %v219, %v218
    %v231 = vpack.c.b16 %v221, %v220
    %v232 = vpack.c.b16 %v223, %v222
    %v233 = vpack.c.b16 %v225, %v224
    %242 = vmatpush.bf16.msra.mxu0 %v233
    %243 = vmatpush.bf16.msra.mxu0 %v232
    %244 = vmatpush.bf16.msra.mxu0 %v231
    %245 = vmatpush.bf16.msra.mxu0 %v230
    %246 = vmatpush.bf16.msra.mxu0 %v229
    %247 = vmatpush.bf16.msra.mxu0 %v228
    %248 = vmatpush.bf16.msra.mxu0 %v227
    %249 = vmatpush.bf16.msra.mxu0 %v226
    %250 = vmatmul.bf16.gmra.mxu0 %v173
    %v251 = vpop.f32.mrf.mxu0
    %v252 = vadd.f32 %v192, %v251
    %v253 = vpop.f32.mrf.mxu0
    %254 = vdwg.mxu0
    %v255 = vtanh.pop %v252
    %v256 = vmul.f32 %v255, 5.0
    %v257 = vpack.c.bf16 %v256, %v256
    %258 = vst [vmem:[%s7] sm:$0xf] %v257
    // Predicated region
    $region38: #{policy_net_forward.1} parent=1 // pred_check
      _
    $region39: #{policy_net_forward.1} parent=1 // pred_check_branch
      %260 = sbr.rel (0) target = $region41
    $region40: #{policy_net_forward.1} parent=1 // pred_region
      _
    $region41: #{policy_net_forward.1} parent=1 // pred_fallthru
      _
    // Predicated region
    $region42: #{policy_net_forward.1} parent=1 // pred_check
      _
    $region43: #{policy_net_forward.1} parent=1 // pred_check_branch
      %262 = sbr.rel (0) target = $region45
    $region44: #{policy_net_forward.1} parent=1 // pred_region
      _
    $region45: #{policy_net_forward.1} parent=1 // pred_fallthru
      _
    %263 = vsyncpa [#allocation3], 1
    %264 = vsyncpa [#allocation5], 1

</llo_original>
